<compile_context>
chip_gen: v6e
topology: v6e:2x2x1
jax: 0.10.0
libtpu: 0.0.40
codegen_flags: <defaults>
</compile_context>

<pallas_src>
import functools

import jax
import jax.numpy as jnp
from jax import lax
from jax.experimental import pallas as pl
from jax.experimental.pallas import tpu as pltpu


def _layernorm_kernel(x_ref, w_ref, b_ref, o_ref, *, eps: float):
    # x_ref/o_ref: (block_rows, d); w_ref/b_ref: (1, d), resident across steps.
    x = x_ref[...]
    d = x.shape[-1]
    inv_d = jnp.float32(1.0 / d)

    xf = x.astype(jnp.float32)

    # Single pass over the tile: both reductions reuse the same loads.
    s1 = jnp.sum(xf, axis=-1, keepdims=True)            # (block_rows, 1)
    s2 = jnp.sum(xf * xf, axis=-1, keepdims=True)        # (block_rows, 1)
    mean = s1 * inv_d
    var = jnp.maximum(s2 * inv_d - mean * mean, 0.0)      # guard cancellation

    # rsqrt (EUP slot) + multiply instead of sqrt-then-divide.
    inv = lax.rsqrt(var + jnp.float32(eps))

    # weight / bias already f32 (cast once in the wrapper).
    o_ref[...] = ((xf - mean) * inv * w_ref[...] + b_ref[...]).astype(o_ref.dtype)


def _choose_block_rows(rows: int, d: int, itemsize: int) -> int:
    """Rows per block: ~4 MiB of input, bounded by a conservative VMEM budget."""
    target_bytes = 4 * 1024 * 1024      # streaming kernels need >= ~1 MiB tiles
    vmem_budget = 24 * 1024 * 1024      # fits comfortably on v7x's 64 MiB / TC
    # Per-row working set: in + out, double-buffered, plus ~2 f32 temporaries.
    bytes_per_row_io = max(1, d * itemsize)
    bytes_per_row_ws = max(1, 4 * d * itemsize + 2 * d * 4)

    by_target = target_bytes // bytes_per_row_io
    by_vmem = vmem_budget // bytes_per_row_ws
    br = max(1, min(by_target, by_vmem))

    if br >= rows:
        # Single block covering every row (block dim == full array dim is legal).
        return rows
    # Multiple of 32 covers f32 / bf16 / int8 sublane packing granularity.
    return max(32, (br // 32) * 32)


def _vmem_limit_bytes() -> int:
    # Leave headroom for Mosaic scratch: ~70% of physical VMEM, capped at 100 MiB
    # (v5e/v6e have 128 MiB; v7x only 64 MiB per TensorCore).
    try:
        cap = pltpu.get_tpu_info().vmem_capacity_bytes
        return int(min(100 * 1024 * 1024, 0.7 * cap))
    except Exception:
        return 48 * 1024 * 1024


def layernorm(x: jax.Array, weight: jax.Array, bias: jax.Array,
              eps: float = 1e-5) -> jax.Array:
    """LayerNorm over the last axis of x ([batch, seq, d_model])."""
    batch, seq, d_model = x.shape
    rows = batch * seq
    x2d = x.reshape(rows, d_model)                     # free (no copy semantics)

    # Params: (1, d_model) f32, resident in VMEM across all grid steps.
    w2d = weight.reshape(1, d_model).astype(jnp.float32)
    b2d = bias.reshape(1, d_model).astype(jnp.float32)

    block_rows = _choose_block_rows(rows, d_model, x.dtype.itemsize)
    grid = (pl.cdiv(rows, block_rows),)

    out2d = pl.pallas_call(
        functools.partial(_layernorm_kernel, eps=eps),
        out_shape=jax.ShapeDtypeStruct((rows, d_model), x.dtype),
        grid_spec=pltpu.PrefetchScalarGridSpec(
            num_scalar_prefetch=0,
            grid=grid,
            in_specs=[
                # x: tiled over rows, full d_model per block so the per-row
                # reduction stays inside one block.  Ragged last block (if any)
                # is masked by Pallas; no wrapper padding needed.
                pl.BlockSpec((block_rows, d_model), lambda i: (i, 0)),
                # weight / bias: constant index_map -> stay resident in VMEM.
                pl.BlockSpec((1, d_model), lambda i: (0, 0)),
                pl.BlockSpec((1, d_model), lambda i: (0, 0)),
            ],
            out_specs=pl.BlockSpec((block_rows, d_model), lambda i: (i, 0)),
        ),
        compiler_params=pltpu.CompilerParams(
            # Rows are independent -> shard the row axis across TensorCores.
            dimension_semantics=("parallel",),
            vmem_limit_bytes=_vmem_limit_bytes(),
        ),
    )(x2d, w2d, b2d)

    return out2d.reshape(batch, seq, d_model)


if __name__ == "__main__":
    batch_size = 2
    seq_len = 3
    d_model = 10
    eps = 1e-5

    key = jax.random.PRNGKey(0)
    x = jax.random.normal(key, (batch_size, seq_len, d_model), dtype=jnp.float32)

    # Matches nn.Parameter(torch.ones(...)) / nn.Parameter(torch.zeros(...)).
    weight = jnp.ones((d_model,), dtype=jnp.float32)
    bias = jnp.zeros((d_model,), dtype=jnp.float32)

    out = layernorm(x, weight, bias, eps=eps)
    out = jax.block_until_ready(out)

    # Reference check in plain JAX (same semantics as the torch module).
    mean = x.mean(-1, keepdims=True)
    xc = x - mean
    scale = jnp.sqrt((xc ** 2).mean(-1, keepdims=True) + eps)
    ref = (xc / scale) * weight + bias
    assert jnp.allclose(out, ref, atol=1e-5, rtol=1e-5), "mismatch vs reference"

    print("KERNEL_OK")
</pallas_src>

<mosaic_0001>
module attributes {stable_mosaic.version = 11 : i64} {
  func.func @_layernorm_kernel(%arg0: i32, %arg1: memref<6x10xf32, #tpu.memory_space<vmem>>, %arg2: memref<1x10xf32, #tpu.memory_space<vmem>>, %arg3: memref<1x10xf32, #tpu.memory_space<vmem>>, %arg4: memref<6x10xf32, #tpu.memory_space<vmem>>) attributes {dimension_semantics = [#tpu.dimension_semantics<parallel>], iteration_bounds = array<i64: 1>, scalar_prefetch = 0 : i64, scratch_operands = 0 : i64, tpu.core_type = #tpu.core_type<tc>, window_params = [{transform_indices = @transform_0, window_bounds = array<i64: 6, 10>}, {pipeline_mode = #tpu.pipeline_mode<synchronous>, transform_indices = @transform_1, window_bounds = array<i64: 1, 10>}, {pipeline_mode = #tpu.pipeline_mode<synchronous>, transform_indices = @transform_2, window_bounds = array<i64: 1, 10>}, {transform_indices = @transform_3, window_bounds = array<i64: 6, 10>}]} {
    %c0 = arith.constant 0 : index
    %c0_0 = arith.constant 0 : index
    %0 = vector.load %arg1[%c0, %c0_0] : memref<6x10xf32, #tpu.memory_space<vmem>>, vector<6x10xf32>
    %cst = arith.constant dense<0.000000e+00> : vector<6xf32>
    %1 = vector.multi_reduction <add>, %0, %cst [1] : vector<6x10xf32> to vector<6xf32>
    %2 = vector.shape_cast %1 : vector<6xf32> to vector<6x1xf32>
    %3 = arith.mulf %0, %0 : vector<6x10xf32>
    %cst_1 = arith.constant dense<0.000000e+00> : vector<6xf32>
    %4 = vector.multi_reduction <add>, %3, %cst_1 [1] : vector<6x10xf32> to vector<6xf32>
    %5 = vector.shape_cast %4 : vector<6xf32> to vector<6x1xf32>
    %cst_2 = arith.constant 1.000000e-01 : f32
    %6 = vector.broadcast %cst_2 : f32 to vector<6x1xf32>
    %7 = arith.mulf %2, %6 : vector<6x1xf32>
    %cst_3 = arith.constant 1.000000e-01 : f32
    %8 = vector.broadcast %cst_3 : f32 to vector<6x1xf32>
    %9 = arith.mulf %5, %8 : vector<6x1xf32>
    %10 = arith.mulf %7, %7 : vector<6x1xf32>
    %11 = arith.subf %9, %10 : vector<6x1xf32>
    %cst_4 = arith.constant 0.000000e+00 : f32
    %12 = vector.broadcast %cst_4 : f32 to vector<6x1xf32>
    %13 = arith.maximumf %11, %12 : vector<6x1xf32>
    %cst_5 = arith.constant 9.99999974E-6 : f32
    %14 = vector.broadcast %cst_5 : f32 to vector<6x1xf32>
    %15 = arith.addf %13, %14 : vector<6x1xf32>
    %16 = math.rsqrt %15 : vector<6x1xf32>
    %17 = vector.broadcast %7 : vector<6x1xf32> to vector<6x10xf32>
    %18 = arith.subf %0, %17 : vector<6x10xf32>
    %19 = vector.broadcast %16 : vector<6x1xf32> to vector<6x10xf32>
    %20 = arith.mulf %18, %19 : vector<6x10xf32>
    %c0_6 = arith.constant 0 : index
    %c0_7 = arith.constant 0 : index
    %21 = vector.load %arg2[%c0_6, %c0_7] : memref<1x10xf32, #tpu.memory_space<vmem>>, vector<1x10xf32>
    %22 = vector.broadcast %21 : vector<1x10xf32> to vector<6x10xf32>
    %23 = arith.mulf %20, %22 : vector<6x10xf32>
    %c0_8 = arith.constant 0 : index
    %c0_9 = arith.constant 0 : index
    %24 = vector.load %arg3[%c0_8, %c0_9] : memref<1x10xf32, #tpu.memory_space<vmem>>, vector<1x10xf32>
    %25 = vector.broadcast %24 : vector<1x10xf32> to vector<6x10xf32>
    %26 = arith.addf %23, %25 : vector<6x10xf32>
    %c0_10 = arith.constant 0 : index
    %c0_11 = arith.constant 0 : index
    %27 = vector.load %arg4[%c0_10, %c0_11] : memref<6x10xf32, #tpu.memory_space<vmem>>, vector<6x10xf32>
    tpu.vector_store %arg4[%c0_10, %c0_11], %26 {strides = array<i32>} : memref<6x10xf32, #tpu.memory_space<vmem>>, vector<6x10xf32>,
    return
  }
  func.func @transform_0(%arg0: i32) -> (i32, i32) {
    %c0_i32 = arith.constant 0 : i32
    %c0_i32_0 = arith.constant 0 : i32
    return %arg0, %c0_i32 : i32, i32
  }
  func.func @transform_1(%arg0: i32) -> (i32, i32) {
    %c0_i32 = arith.constant 0 : i32
    %c0_i32_0 = arith.constant 0 : i32
    %c0_i32_1 = arith.constant 0 : i32
    return %c0_i32, %c0_i32_0 : i32, i32
  }
  func.func @transform_2(%arg0: i32) -> (i32, i32) {
    %c0_i32 = arith.constant 0 : i32
    %c0_i32_0 = arith.constant 0 : i32
    %c0_i32_1 = arith.constant 0 : i32
    return %c0_i32, %c0_i32_0 : i32, i32
  }
  func.func @transform_3(%arg0: i32) -> (i32, i32) {
    %c0_i32 = arith.constant 0 : i32
    %c0_i32_0 = arith.constant 0 : i32
    return %arg0, %c0_i32 : i32, i32
  }
}

</mosaic_0001>

<llo_original>
// kernel: tpu_custom_call.1
$region0: #{tpu_custom_call.1}
  #allocation0 [shape = 'u32[]', space=smem, size = 0x4, offset = 0x4, fixed_abs, tag = 'smem constant byte address 0x4 - core index']
  #allocation1 [shape = 'u32[144,128]{1,0:T(1,128)}', space=vmem, size = 0x12000, scoped, tag = 'internal scratch']
  %s0 = inlined_call_operand.hbm [shape: f32[6,10], index: 0, kind: input, shape index: {}]
  %s1 = inlined_call_operand.vmem [shape: f32[1,10], index: 1, kind: input, shape index: {}]
  %s2 = inlined_call_operand.vmem [shape: f32[1,10], index: 2, kind: input, shape index: {}]
  %s3 = inlined_call_operand.hbm [shape: f32[6,10], index: 3, kind: output, shape index: {}]
  %s4 = sld [smem:[#allocation0]]
  $region26: #{tpu_custom_call.1} parent=0
    _
  %s6 = ssub.s32 1, %s4
  %s7 = scalar_select 0, %s6, %s4
  $region1: #{tpu_custom_call.1} parent=0
    #allocation2 [shape = 'u8[4096]{0}', space=vmem, size = 0x1000, scoped, tag = 'input window, operand 0, single buffered']
    #allocation3 [shape = 's32[1]{0}', space=sflag, size = 0x4, scoped, tag = 'scoped memory for tpu_custom_call.1']
    #allocation4 [shape = 's32[1]{0}', space=sflag, size = 0x4, scoped, tag = 'scoped memory for tpu_custom_call.1']
    #allocation5 [shape = 'u8[4096]{0}', space=vmem, size = 0x1000, scoped, tag = 'output window, operand 0, single buffered']
    %8 = vsyncpa [#allocation3], 0
    %9 = vsyncpa [#allocation4], 0
    // Predicated region
    $region2: #{tpu_custom_call.1} parent=1 // pred_check
      _
    $region3: #{tpu_custom_call.1} parent=1 // pred_check_branch
      %11 = sbr.rel (0) target = $region5
    $region4: #{tpu_custom_call.1} parent=1 // pred_region
      %s13 = ssub.s32 128, 128
      %14 = vsyncadd [#allocation3], %s13
      %s16 = sshll.u32 [#allocation2], 4
      %s17 = int_to_ptr.vmem [resolvable:$true] %s16
      %19 = dma.hbm_to_vmem [thread:$0]  %s0, 128, %s17, [#allocation3]
    $region5: #{tpu_custom_call.1} parent=1 // pred_fallthru
      _
    // Predicated region
    $region6: #{tpu_custom_call.1} parent=1 // pred_check
      _
    $region7: #{tpu_custom_call.1} parent=1 // pred_check_branch
      %21 = sbr.rel (0) target = $region9
    $region8: #{tpu_custom_call.1} parent=1 // pred_region
      _
    $region9: #{tpu_custom_call.1} parent=1 // pred_fallthru
      _
    // Predicated region
    $region10: #{tpu_custom_call.1} parent=1 // pred_check
      _
    $region11: #{tpu_custom_call.1} parent=1 // pred_check_branch
      %23 = sbr.rel (0) target = $region13
    $region12: #{tpu_custom_call.1} parent=1 // pred_region
      _
    $region13: #{tpu_custom_call.1} parent=1 // pred_fallthru
      _
    // Predicated region
    $region14: #{tpu_custom_call.1} parent=1 // pred_check
      _
    $region15: #{tpu_custom_call.1} parent=1 // pred_check_branch
      %25 = sbr.rel (0) target = $region17
    $region16: #{tpu_custom_call.1} parent=1 // pred_region
      %26 = dma.done [#allocation3], 128
    $region17: #{tpu_custom_call.1} parent=1 // pred_fallthru
      _
    %v27 = vld [vmem:[#allocation2] sm:$0x3f]
    %vm28 = vcmask 78848
    %v29 = vsel %vm28, %v27, 0.0
    %30 = vadd.xlane.f32.xlu0 %v29
    %v31 = vpop.xlane.xlu0 %30
    %v32 = vmul.f32 %v27, %v27
    %v33 = vsel %vm28, %v32, 0.0
    %34 = vadd.xlane.f32.xlu0 %v33
    %v35 = vpop.xlane.xlu0 %34
    %v36 = vmul.f32 %v31, 0.1
    %v37 = vmul.f32 %v35, 0.1
    %v38 = vmul.f32 %v36, %v36
    %v39 = vsub.f32 %v37, %v38
    %v40 = vmax.f32 %v39, 0.0
    %v41 = vadd.f32 %v40, 1e-05
    %v42 = vrsqrt.pop %v41
    %v43 = vsub.f32 %v27, %v36
    %v44 = vmul.f32 %v43, %v42
    %v45 = vld [vmem:[%s1] sm:$0x1]
    %v47 = vlaneseq
    %v48 = vshrl.u32 %v47, 7
    %v49 = vsub.s32 0, %v48
    %v50 = vrot.slane %v45, %v49
    %v52 = vmul.f32 %v44, %v50
    %v53 = vld [vmem:[%s2] sm:$0x1]
    %v55 = vlaneseq
    %v56 = vshrl.u32 %v55, 7
    %v57 = vsub.s32 0, %v56
    %v58 = vrot.slane %v53, %v57
    %v60 = vadd.f32 %v52, %v58
    %61 = vst.msk [vmem:[#allocation5] sm:$0x3f] %vm28, %v60
    // Predicated region
    $region18: #{tpu_custom_call.1} parent=1 // pred_check
      _
    $region19: #{tpu_custom_call.1} parent=1 // pred_check_branch
      %63 = sbr.rel (0) target = $region21
    $region20: #{tpu_custom_call.1} parent=1 // pred_region
      %s65 = ssub.s32 128, 128
      %66 = vsyncadd [#allocation4], %s65
      %s68 = sshll.u32 [#allocation5], 4
      %s69 = int_to_ptr.vmem [resolvable:$true] %s68
      %71 = dma.vmem_to_hbm [thread:$0]  %s69, 128, %s3, [#allocation4]
    $region21: #{tpu_custom_call.1} parent=1 // pred_fallthru
      _
    // Predicated region
    $region22: #{tpu_custom_call.1} parent=1 // pred_check
      _
    $region23: #{tpu_custom_call.1} parent=1 // pred_check_branch
      %73 = sbr.rel (0) target = $region25
    $region24: #{tpu_custom_call.1} parent=1 // pred_region
      %74 = dma.done [#allocation4], 128
    $region25: #{tpu_custom_call.1} parent=1 // pred_fallthru
      _
    %75 = vsyncpa [#allocation3], 1
    %76 = vsyncpa [#allocation4], 1

</llo_original>
